<compile_context>
chip_gen: v6e
topology: v6e:2x2x1
jax: 0.10.0
libtpu: 0.0.40
codegen_flags: <defaults>
</compile_context>

<pallas_src>
import functools

import jax
import jax.numpy as jnp
from jax.experimental import pallas as pl
from jax.experimental.pallas import tpu as pltpu

_LANE = 128     # f32 lane width
_SUBLANE = 8    # f32 sublane height


def _round_up(n, m):
    return ((n + m - 1) // m) * m


def _mlp_kernel(num_layers, x_ref, w_in_ref, b_in_ref, *rest):
    """rest = (w_h_ref, b_h_ref,) if num_layers > 0, then w_out_ref, b_out_ref, o_ref."""
    if num_layers > 0:
        w_h_ref, b_h_ref, w_out_ref, b_out_ref, o_ref = rest
    else:
        w_out_ref, b_out_ref, o_ref = rest

    # Input layer: Linear, no activation (matches the PyTorch forward).
    h = (
        jnp.dot(x_ref[...], w_in_ref[...], preferred_element_type=jnp.float32)
        + b_in_ref[...]
    )

    # Hidden layers: tanh(Linear(h)). Python-unrolled with static stack
    # indices so the LLO scheduler sees every layer's MXU/EUP work at once.
    for i in range(num_layers):
        h = jnp.tanh(
            jnp.dot(h, w_h_ref[i], preferred_element_type=jnp.float32)
            + b_h_ref[i]
        )

    # Output layer: Linear, no activation.
    out = (
        jnp.dot(h, w_out_ref[...], preferred_element_type=jnp.float32)
        + b_out_ref[...]
    )
    o_ref[...] = out.astype(o_ref.dtype)


def mlp_tanh_dynamics_pallas(x, params, num_layers, *, block_b=1024):
    """x: (B, input_dim) f32. params: dict of (in,out) weights and (out,) biases.

    block_b: batch tile size (rounded to a multiple of 8). Weights stay
    resident in VMEM across all batch tiles.
    """
    B, input_dim = x.shape
    hidden = params["w_out"].shape[1]

    # Lane-dense padded feature dims (zero padding is exact: padded lanes stay
    # zero through every matmul / bias-add / tanh and are sliced off at the end).
    in_p = _round_up(input_dim, _LANE)
    hid_p = _round_up(hidden, _LANE)

    # Batch tile: multiple of the f32 sublane, no bigger than the (padded) batch.
    tb = min(block_b, _round_up(B, _SUBLANE))
    tb = _round_up(tb, _SUBLANE)
    b_p = _round_up(B, tb)

    def pad_w(w, rows, cols):
        return jnp.pad(w, ((0, rows - w.shape[0]), (0, cols - w.shape[1])))

    def pad_bias(b, cols):
        return jnp.pad(b, (0, cols - b.shape[0])).reshape(1, cols)

    x_p = jnp.pad(x, ((0, b_p - B), (0, in_p - input_dim)))

    operands = [
        x_p,
        pad_w(params["w_in"], in_p, hid_p),
        pad_bias(params["b_in"], hid_p),
    ]
    if num_layers > 0:
        # Stack hidden-layer weights / biases -> one resident operand each.
        w_h = jnp.stack(
            [pad_w(params[f"w_h{i}"], hid_p, hid_p) for i in range(num_layers)]
        )  # (L, hid_p, hid_p)
        b_h = jnp.stack(
            [pad_bias(params[f"b_h{i}"], hid_p) for i in range(num_layers)]
        )  # (L, 1, hid_p)
        operands.append(w_h)
        operands.append(b_h)
    operands.append(pad_w(params["w_out"], hid_p, hid_p))
    operands.append(pad_bias(params["b_out"], hid_p))

    grid = (b_p // tb,)

    # Activations: tiled along the batch grid axis.
    in_specs = [pl.BlockSpec((tb, in_p), lambda i: (i, 0))]
    # Weights / biases: full-array blocks with constant index_maps -> DMA'd
    # once, resident across every grid step.
    for op in operands[1:]:
        nd = op.ndim
        in_specs.append(
            pl.BlockSpec(op.shape, (lambda i: (0, 0)) if nd == 2 else (lambda i: (0, 0, 0)))
        )
    out_spec = pl.BlockSpec((tb, hid_p), lambda i: (i, 0))

    kernel = functools.partial(_mlp_kernel, num_layers)

    # Advisory cost hint for the XLA scheduler around the custom call.
    flops = 2 * b_p * hid_p * (in_p + (num_layers + 1) * hid_p)
    bytes_accessed = 4 * (
        b_p * in_p                                   # x
        + in_p * hid_p + hid_p                       # input layer
        + num_layers * (hid_p * hid_p + hid_p)       # hidden layers
        + hid_p * hid_p + hid_p                      # output layer
        + b_p * hid_p                                # out
    )
    cost = pl.CostEstimate(
        flops=flops,
        transcendentals=num_layers * b_p * hid_p,
        bytes_accessed=bytes_accessed,
    )

    out_p = pl.pallas_call(
        kernel,
        out_shape=jax.ShapeDtypeStruct((b_p, hid_p), x.dtype),
        grid=grid,
        in_specs=in_specs,
        out_specs=out_spec,
        compiler_params=pltpu.CompilerParams(
            # Batch tiles are independent -> shard across both TCs on v7x.
            dimension_semantics=("parallel",),
        ),
        cost_estimate=cost,
    )(*operands)

    return out_p[:B, :hidden]


def init_params(key, input_dim, hidden_size, num_layers):
    """Deterministic PyTorch-style uniform(-1/sqrt(fan_in), 1/sqrt(fan_in)) init.

    Weights are stored already transposed: shape (in_features, out_features).
    """
    params = {}

    def linear(key, fan_in, fan_out):
        kw, kb = jax.random.split(key)
        bound = 1.0 / jnp.sqrt(fan_in)
        w = jax.random.uniform(kw, (fan_in, fan_out), jnp.float32, -bound, bound)
        b = jax.random.uniform(kb, (fan_out,), jnp.float32, -bound, bound)
        return w, b

    keys = jax.random.split(key, num_layers + 2)
    params["w_in"], params["b_in"] = linear(keys[0], input_dim, hidden_size)
    for i in range(num_layers):
        params[f"w_h{i}"], params[f"b_h{i}"] = linear(
            keys[1 + i], hidden_size, hidden_size
        )
    params["w_out"], params["b_out"] = linear(keys[-1], hidden_size, hidden_size)
    return params


def mlp_reference(x, params, num_layers):
    """Pure-JAX reference mirroring the PyTorch forward."""
    h = x @ params["w_in"] + params["b_in"]
    for i in range(num_layers):
        h = jnp.tanh(h @ params[f"w_h{i}"] + params[f"b_h{i}"])
    return h @ params["w_out"] + params["b_out"]


if __name__ == "__main__":
    input_dim = 16
    hidden_size = 32
    num_layers = 2
    batch = 200  # deliberately not a multiple of the batch tile

    key = jax.random.PRNGKey(0)
    k_params, k_x = jax.random.split(key)

    params = init_params(k_params, input_dim, hidden_size, num_layers)
    x = jax.random.normal(k_x, (batch, input_dim), jnp.float32)

    # Small block_b so the demo exercises a multi-step batch grid + padding.
    out = mlp_tanh_dynamics_pallas(x, params, num_layers, block_b=64)
    out = jax.block_until_ready(out)

    ref = mlp_reference(x, params, num_layers)
    assert out.shape == (batch, hidden_size), out.shape
    assert jnp.allclose(out, ref, atol=1e-5, rtol=1e-5), float(
        jnp.max(jnp.abs(out - ref))
    )

    print("KERNEL_OK")
</pallas_src>

<mosaic_0001>
module attributes {stable_mosaic.version = 11 : i64} {
  func.func @_mlp_kernel(%arg0: i32, %arg1: memref<64x128xf32, #tpu.memory_space<vmem>>, %arg2: memref<128x128xf32, #tpu.memory_space<vmem>>, %arg3: memref<1x128xf32, #tpu.memory_space<vmem>>, %arg4: memref<2x128x128xf32, #tpu.memory_space<vmem>>, %arg5: memref<2x1x128xf32, #tpu.memory_space<vmem>>, %arg6: memref<128x128xf32, #tpu.memory_space<vmem>>, %arg7: memref<1x128xf32, #tpu.memory_space<vmem>>, %arg8: memref<64x128xf32, #tpu.memory_space<vmem>>) attributes {dimension_semantics = [#tpu.dimension_semantics<parallel>], iteration_bounds = array<i64: 4>, scalar_prefetch = 0 : i64, scratch_operands = 0 : i64, tpu.core_type = #tpu.core_type<tc>, window_params = [{transform_indices = @transform_0, window_bounds = array<i64: 64, 128>}, {pipeline_mode = #tpu.pipeline_mode<synchronous>, transform_indices = @transform_1, window_bounds = array<i64: 128, 128>}, {pipeline_mode = #tpu.pipeline_mode<synchronous>, transform_indices = @transform_2, window_bounds = array<i64: 1, 128>}, {pipeline_mode = #tpu.pipeline_mode<synchronous>, transform_indices = @transform_3, window_bounds = array<i64: 2, 128, 128>}, {pipeline_mode = #tpu.pipeline_mode<synchronous>, transform_indices = @transform_4, window_bounds = array<i64: 2, 1, 128>}, {pipeline_mode = #tpu.pipeline_mode<synchronous>, transform_indices = @transform_5, window_bounds = array<i64: 128, 128>}, {pipeline_mode = #tpu.pipeline_mode<synchronous>, transform_indices = @transform_6, window_bounds = array<i64: 1, 128>}, {transform_indices = @transform_7, window_bounds = array<i64: 64, 128>}]} {
    %c0 = arith.constant 0 : index
    %c0_0 = arith.constant 0 : index
    %0 = vector.load %arg1[%c0, %c0_0] : memref<64x128xf32, #tpu.memory_space<vmem>>, vector<64x128xf32>
    %c0_1 = arith.constant 0 : index
    %c0_2 = arith.constant 0 : index
    %1 = vector.load %arg2[%c0_1, %c0_2] : memref<128x128xf32, #tpu.memory_space<vmem>>, vector<128x128xf32>
    %cst = arith.constant dense<0.000000e+00> : vector<64x128xf32>
    %2 = tpu.matmul %0, %1, %cst {dimension_numbers = #tpu.dot_dimension_numbers<[1], [0], [0], [1], [0, 0, 1, 1], [], []>} : vector<64x128xf32>, vector<128x128xf32>, vector<64x128xf32> -> vector<64x128xf32>
    %c0_3 = arith.constant 0 : index
    %c0_4 = arith.constant 0 : index
    %3 = vector.load %arg3[%c0_3, %c0_4] : memref<1x128xf32, #tpu.memory_space<vmem>>, vector<1x128xf32>
    %4 = vector.broadcast %3 : vector<1x128xf32> to vector<64x128xf32>
    %5 = arith.addf %2, %4 : vector<64x128xf32>
    %c0_5 = arith.constant 0 : index
    %c0_6 = arith.constant 0 : index
    %c0_7 = arith.constant 0 : index
    %6 = vector.load %arg4[%c0_5, %c0_6, %c0_7] : memref<2x128x128xf32, #tpu.memory_space<vmem>>, vector<1x128x128xf32>
    %7 = vector.shape_cast %6 : vector<1x128x128xf32> to vector<128x128xf32>
    %cst_8 = arith.constant dense<0.000000e+00> : vector<64x128xf32>
    %8 = tpu.matmul %5, %7, %cst_8 {dimension_numbers = #tpu.dot_dimension_numbers<[1], [0], [0], [1], [0, 0, 1, 1], [], []>} : vector<64x128xf32>, vector<128x128xf32>, vector<64x128xf32> -> vector<64x128xf32>
    %c0_9 = arith.constant 0 : index
    %c0_10 = arith.constant 0 : index
    %c0_11 = arith.constant 0 : index
    %9 = vector.load %arg5[%c0_9, %c0_10, %c0_11] : memref<2x1x128xf32, #tpu.memory_space<vmem>>, vector<1x1x128xf32>
    %10 = vector.shape_cast %9 : vector<1x1x128xf32> to vector<1x128xf32>
    %11 = vector.broadcast %10 : vector<1x128xf32> to vector<64x128xf32>
    %12 = arith.addf %8, %11 : vector<64x128xf32>
    %13 = math.tanh %12 : vector<64x128xf32>
    %c1 = arith.constant 1 : index
    %c0_12 = arith.constant 0 : index
    %c0_13 = arith.constant 0 : index
    %14 = vector.load %arg4[%c1, %c0_12, %c0_13] : memref<2x128x128xf32, #tpu.memory_space<vmem>>, vector<1x128x128xf32>
    %15 = vector.shape_cast %14 : vector<1x128x128xf32> to vector<128x128xf32>
    %cst_14 = arith.constant dense<0.000000e+00> : vector<64x128xf32>
    %16 = tpu.matmul %13, %15, %cst_14 {dimension_numbers = #tpu.dot_dimension_numbers<[1], [0], [0], [1], [0, 0, 1, 1], [], []>} : vector<64x128xf32>, vector<128x128xf32>, vector<64x128xf32> -> vector<64x128xf32>
    %c1_15 = arith.constant 1 : index
    %c0_16 = arith.constant 0 : index
    %c0_17 = arith.constant 0 : index
    %17 = vector.load %arg5[%c1_15, %c0_16, %c0_17] : memref<2x1x128xf32, #tpu.memory_space<vmem>>, vector<1x1x128xf32>
    %18 = vector.shape_cast %17 : vector<1x1x128xf32> to vector<1x128xf32>
    %19 = vector.broadcast %18 : vector<1x128xf32> to vector<64x128xf32>
    %20 = arith.addf %16, %19 : vector<64x128xf32>
    %21 = math.tanh %20 : vector<64x128xf32>
    %c0_18 = arith.constant 0 : index
    %c0_19 = arith.constant 0 : index
    %22 = vector.load %arg6[%c0_18, %c0_19] : memref<128x128xf32, #tpu.memory_space<vmem>>, vector<128x128xf32>
    %cst_20 = arith.constant dense<0.000000e+00> : vector<64x128xf32>
    %23 = tpu.matmul %21, %22, %cst_20 {dimension_numbers = #tpu.dot_dimension_numbers<[1], [0], [0], [1], [0, 0, 1, 1], [], []>} : vector<64x128xf32>, vector<128x128xf32>, vector<64x128xf32> -> vector<64x128xf32>
    %c0_21 = arith.constant 0 : index
    %c0_22 = arith.constant 0 : index
    %24 = vector.load %arg7[%c0_21, %c0_22] : memref<1x128xf32, #tpu.memory_space<vmem>>, vector<1x128xf32>
    %25 = vector.broadcast %24 : vector<1x128xf32> to vector<64x128xf32>
    %26 = arith.addf %23, %25 : vector<64x128xf32>
    %c0_23 = arith.constant 0 : index
    %c0_24 = arith.constant 0 : index
    %27 = vector.load %arg8[%c0_23, %c0_24] : memref<64x128xf32, #tpu.memory_space<vmem>>, vector<64x128xf32>
    tpu.vector_store %arg8[%c0_23, %c0_24], %26 {strides = array<i32>} : memref<64x128xf32, #tpu.memory_space<vmem>>, vector<64x128xf32>,
    return
  }
  func.func @transform_0(%arg0: i32) -> (i32, i32) {
    %c0_i32 = arith.constant 0 : i32
    %c0_i32_0 = arith.constant 0 : i32
    return %arg0, %c0_i32 : i32, i32
  }
  func.func @transform_1(%arg0: i32) -> (i32, i32) {
    %c0_i32 = arith.constant 0 : i32
    %c0_i32_0 = arith.constant 0 : i32
    %c0_i32_1 = arith.constant 0 : i32
    return %c0_i32, %c0_i32_0 : i32, i32
  }
  func.func @transform_2(%arg0: i32) -> (i32, i32) {
    %c0_i32 = arith.constant 0 : i32
    %c0_i32_0 = arith.constant 0 : i32
    %c0_i32_1 = arith.constant 0 : i32
    return %c0_i32, %c0_i32_0 : i32, i32
  }
  func.func @transform_3(%arg0: i32) -> (i32, i32, i32) {
    %c0_i32 = arith.constant 0 : i32
    %c0_i32_0 = arith.constant 0 : i32
    %c0_i32_1 = arith.constant 0 : i32
    %c0_i32_2 = arith.constant 0 : i32
    return %c0_i32, %c0_i32_0, %c0_i32_1 : i32, i32, i32
  }
  func.func @transform_4(%arg0: i32) -> (i32, i32, i32) {
    %c0_i32 = arith.constant 0 : i32
    %c0_i32_0 = arith.constant 0 : i32
    %c0_i32_1 = arith.constant 0 : i32
    %c0_i32_2 = arith.constant 0 : i32
    return %c0_i32, %c0_i32_0, %c0_i32_1 : i32, i32, i32
  }
  func.func @transform_5(%arg0: i32) -> (i32, i32) {
    %c0_i32 = arith.constant 0 : i32
    %c0_i32_0 = arith.constant 0 : i32
    %c0_i32_1 = arith.constant 0 : i32
    return %c0_i32, %c0_i32_0 : i32, i32
  }
  func.func @transform_6(%arg0: i32) -> (i32, i32) {
    %c0_i32 = arith.constant 0 : i32
    %c0_i32_0 = arith.constant 0 : i32
    %c0_i32_1 = arith.constant 0 : i32
    return %c0_i32, %c0_i32_0 : i32, i32
  }
  func.func @transform_7(%arg0: i32) -> (i32, i32) {
    %c0_i32 = arith.constant 0 : i32
    %c0_i32_0 = arith.constant 0 : i32
    return %arg0, %c0_i32 : i32, i32
  }
}

</mosaic_0001>

<llo_original>
// kernel: tpu_custom_call.1
$region0: #{tpu_custom_call.1}
  #allocation0 [shape = 'u32[]', space=smem, size = 0x4, offset = 0x4, fixed_abs, tag = 'smem constant byte address 0x4 - core index']
  #allocation1 [shape = 'u32[144,128]{1,0:T(1,128)}', space=vmem, size = 0x12000, scoped, tag = 'internal scratch']
  %s0 = inlined_call_operand.hbm [shape: f32[256,128], index: 0, kind: input, shape index: {}]
  %s1 = inlined_call_operand.hbm [shape: f32[128,128], index: 1, kind: input, shape index: {}]
  %s2 = inlined_call_operand.vmem [shape: f32[1,128], index: 2, kind: input, shape index: {}]
  %s3 = inlined_call_operand.hbm [shape: f32[2,128,128], index: 3, kind: input, shape index: {}]
  %s4 = inlined_call_operand.vmem [shape: f32[2,1,128], index: 4, kind: input, shape index: {}]
  %s5 = inlined_call_operand.hbm [shape: f32[128,128], index: 5, kind: input, shape index: {}]
  %s6 = inlined_call_operand.vmem [shape: f32[1,128], index: 6, kind: input, shape index: {}]
  %s7 = inlined_call_operand.hbm [shape: f32[256,128], index: 7, kind: output, shape index: {}]
  %s8 = sld [smem:[#allocation0]]
  $region77: #{tpu_custom_call.1} parent=0
    _
  %s10 = ssub.s32 1, %s8
  %s11 = scalar_select 0, %s10, %s8
  $region1: #{tpu_custom_call.1} parent=0
    #allocation2 [shape = 'u8[65536]{0}', space=vmem, size = 0x10000, scoped, tag = 'input window, operand 0']
    #allocation3 [shape = 's32[2]{0}', space=sflag, size = 0x8, scoped, tag = 'scoped memory for tpu_custom_call.1']
    #allocation4 [shape = 's32[2]{0}', space=sflag, size = 0x8, scoped, tag = 'scoped memory for tpu_custom_call.1']
    #allocation5 [shape = 'u8[65536]{0}', space=vmem, size = 0x10000, scoped, tag = 'input window, operand 1, single buffered']
    #allocation6 [shape = 's32[1]{0}', space=sflag, size = 0x4, scoped, tag = 'scoped memory for tpu_custom_call.1']
    #allocation7 [shape = 'u8[131072]{0}', space=vmem, size = 0x20000, scoped, tag = 'input window, operand 3, single buffered']
    #allocation8 [shape = 'u8[65536]{0}', space=vmem, size = 0x10000, scoped, tag = 'input window, operand 5, single buffered']
    #allocation9 [shape = 's32[1]{0}', space=sflag, size = 0x4, scoped, tag = 'scoped memory for tpu_custom_call.1']
    #allocation10 [shape = 'u8[65536]{0}', space=vmem, size = 0x10000, scoped, tag = 'output window, operand 0']
    %12 = vsyncpa [#allocation3], 0
    %s13 = scalar_lea.sflag [#allocation3], 1
    %14 = vsyncpa %s13, 0
    %15 = vsyncpa [#allocation6], 0
    %16 = vsyncpa [#allocation9], 0
    %17 = vsyncpa [#allocation4], 0
    %s18 = scalar_lea.sflag [#allocation4], 1
    %19 = vsyncpa %s18, 0
    loop: start=0, step=1, limit=6
    $region2: #{tpu_custom_call.1} parent=1 // loop_pre_header
      _
    $region3: #{tpu_custom_call.1} parent=1 // loop_header
      %s21 = sphi 0, %s25
      %p22 = scmp.ge.s32.totalorder %s21, 6
      %s31 = sphi 0, %s33
      %s34 = sphi 0, %s31
      %s35 = sphi 0, %s34
      %s51 = sphi 0, %s35
      %s55 = sphi 0, %s55
      %s57 = sphi 0, %s55
      %s58 = sphi 0, %s57
      %s72 = sphi 0, %s58
      %s76 = sphi 0, %s76
      %s78 = sphi 0, %s76
      %s79 = sphi 0, %s78
      %s93 = sphi 0, %s79
      %s97 = sphi 0, %s97
      %s99 = sphi 0, %s97
      %s100 = sphi 0, %s99
      %s114 = sphi 0, %s100
      %s118 = sphi 0, %s118
      %s120 = sphi 0, %s118
      %s121 = sphi 0, %s120
      %s135 = sphi 0, %s121
      %s139 = sphi 0, %s139
      %s141 = sphi 0, %s139
      %s142 = sphi 0, %s141
      %s156 = sphi 0, %s142
      %s160 = sphi 0, %s160
      %s162 = sphi 0, %s160
      %s163 = sphi 0, %s162
      %s177 = sphi 0, %s163
      %s183 = sphi 0, %s185
      %s186 = sphi 0, %s183
      %s187 = sphi 0, %s186
      %s203 = sphi 0, %s187
    $region4: #{tpu_custom_call.1} parent=1 // loop_header_branch
      %24 = sbr.rel (%p22) target = $region8
    $region5: #{tpu_custom_call.1} parent=1 // loop_body
      %s26 = ssub.s32 %s21, 1
      %s27 = ssub.s32 %s21, 2
      %s28 = sadd.s32 %s21, 1
      %s29 = ssub.s32 %s21, %s28
      %p30 = scmp.eq.s32.totalorder %s29, 0
      %s32 = sadd.s32 %s31, 1
      %s33 = scalar_select %p30, %s31, %s32
      %p36 = pneg %p30
      %p37 = scmp.eq.s32.totalorder %s21, 3
      %p38 = por %p36, %p37
      %p39 = scmp.ne.s32.totalorder %s31, %s34
      %p40 = scmp.eq.s32.totalorder %s21, 0
      %p41 = por %p39, %p40
      %p42 = scmp.ne.s32.totalorder %s31, %s34
      %p43 = scmp.eq.s32.totalorder %s26, 3
      %p44 = por %p42, %p43
      %p45 = scmp.ne.s32.totalorder %s34, %s35
      %p46 = scmp.eq.s32.totalorder %s26, 0
      %p47 = por %p45, %p46
      %p48 = scmp.ne.s32.totalorder %s34, %s35
      %p49 = scmp.eq.s32.totalorder %s27, 3
      %p50 = por %p48, %p49
      %p52 = scmp.ne.s32.totalorder %s35, %s51
      %p53 = scmp.eq.s32.totalorder %s27, 0
      %p54 = por %p52, %p53
      %s56 = sadd.s32 %s55, 1
      %p59 = scmp.eq.s32.totalorder %s21, 3
      %p60 = scmp.ne.s32.totalorder %s55, %s57
      %p61 = scmp.eq.s32.totalorder %s21, 0
      %p62 = por %p60, %p61
      %p63 = scmp.ne.s32.totalorder %s55, %s57
      %p64 = scmp.eq.s32.totalorder %s26, 3
      %p65 = por %p63, %p64
      %p66 = scmp.ne.s32.totalorder %s57, %s58
      %p67 = scmp.eq.s32.totalorder %s26, 0
      %p68 = por %p66, %p67
      %p69 = scmp.ne.s32.totalorder %s57, %s58
      %p70 = scmp.eq.s32.totalorder %s27, 3
      %p71 = por %p69, %p70
      %p73 = scmp.ne.s32.totalorder %s58, %s72
      %p74 = scmp.eq.s32.totalorder %s27, 0
      %p75 = por %p73, %p74
      %s77 = sadd.s32 %s76, 1
      %p80 = scmp.eq.s32.totalorder %s21, 3
      %p81 = scmp.ne.s32.totalorder %s76, %s78
      %p82 = scmp.eq.s32.totalorder %s21, 0
      %p83 = por %p81, %p82
      %p84 = scmp.ne.s32.totalorder %s76, %s78
      %p85 = scmp.eq.s32.totalorder %s26, 3
      %p86 = por %p84, %p85
      %p87 = scmp.ne.s32.totalorder %s78, %s79
      %p88 = scmp.eq.s32.totalorder %s26, 0
      %p89 = por %p87, %p88
      %p90 = scmp.ne.s32.totalorder %s78, %s79
      %p91 = scmp.eq.s32.totalorder %s27, 3
      %p92 = por %p90, %p91
      %p94 = scmp.ne.s32.totalorder %s79, %s93
      %p95 = scmp.eq.s32.totalorder %s27, 0
      %p96 = por %p94, %p95
      %s98 = sadd.s32 %s97, 1
      %p101 = scmp.eq.s32.totalorder %s21, 3
      %p102 = scmp.ne.s32.totalorder %s97, %s99
      %p103 = scmp.eq.s32.totalorder %s21, 0
      %p104 = por %p102, %p103
      %p105 = scmp.ne.s32.totalorder %s97, %s99
      %p106 = scmp.eq.s32.totalorder %s26, 3
      %p107 = por %p105, %p106
      %p108 = scmp.ne.s32.totalorder %s99, %s100
      %p109 = scmp.eq.s32.totalorder %s26, 0
      %p110 = por %p108, %p109
      %p111 = scmp.ne.s32.totalorder %s99, %s100
      %p112 = scmp.eq.s32.totalorder %s27, 3
      %p113 = por %p111, %p112
      %p115 = scmp.ne.s32.totalorder %s100, %s114
      %p116 = scmp.eq.s32.totalorder %s27, 0
      %p117 = por %p115, %p116
      %s119 = sadd.s32 %s118, 1
      %p122 = scmp.eq.s32.totalorder %s21, 3
      %p123 = scmp.ne.s32.totalorder %s118, %s120
      %p124 = scmp.eq.s32.totalorder %s21, 0
      %p125 = por %p123, %p124
      %p126 = scmp.ne.s32.totalorder %s118, %s120
      %p127 = scmp.eq.s32.totalorder %s26, 3
      %p128 = por %p126, %p127
      %p129 = scmp.ne.s32.totalorder %s120, %s121
      %p130 = scmp.eq.s32.totalorder %s26, 0
      %p131 = por %p129, %p130
      %p132 = scmp.ne.s32.totalorder %s120, %s121
      %p133 = scmp.eq.s32.totalorder %s27, 3
      %p134 = por %p132, %p133
      %p136 = scmp.ne.s32.totalorder %s121, %s135
      %p137 = scmp.eq.s32.totalorder %s27, 0
      %p138 = por %p136, %p137
      %s140 = sadd.s32 %s139, 1
      %p143 = scmp.eq.s32.totalorder %s21, 3
      %p144 = scmp.ne.s32.totalorder %s139, %s141
      %p145 = scmp.eq.s32.totalorder %s21, 0
      %p146 = por %p144, %p145
      %p147 = scmp.ne.s32.totalorder %s139, %s141
      %p148 = scmp.eq.s32.totalorder %s26, 3
      %p149 = por %p147, %p148
      %p150 = scmp.ne.s32.totalorder %s141, %s142
      %p151 = scmp.eq.s32.totalorder %s26, 0
      %p152 = por %p150, %p151
      %p153 = scmp.ne.s32.totalorder %s141, %s142
      %p154 = scmp.eq.s32.totalorder %s27, 3
      %p155 = por %p153, %p154
      %p157 = scmp.ne.s32.totalorder %s142, %s156
      %p158 = scmp.eq.s32.totalorder %s27, 0
      %p159 = por %p157, %p158
      %s161 = sadd.s32 %s160, 1
      %p164 = scmp.eq.s32.totalorder %s21, 3
      %p165 = scmp.ne.s32.totalorder %s160, %s162
      %p166 = scmp.eq.s32.totalorder %s21, 0
      %p167 = por %p165, %p166
      %p168 = scmp.ne.s32.totalorder %s160, %s162
      %p169 = scmp.eq.s32.totalorder %s26, 3
      %p170 = por %p168, %p169
      %p171 = scmp.ne.s32.totalorder %s162, %s163
      %p172 = scmp.eq.s32.totalorder %s26, 0
      %p173 = por %p171, %p172
      %p174 = scmp.ne.s32.totalorder %s162, %s163
      %p175 = scmp.eq.s32.totalorder %s27, 3
      %p176 = por %p174, %p175
      %p178 = scmp.ne.s32.totalorder %s163, %s177
      %p179 = scmp.eq.s32.totalorder %s27, 0
      %p180 = por %p178, %p179
      %s181 = ssub.s32 %s21, %s28
      %p182 = scmp.eq.s32.totalorder %s181, 0
      %s184 = sadd.s32 %s183, 1
      %s185 = scalar_select %p182, %s183, %s184
      %p188 = pneg %p182
      %p189 = scmp.eq.s32.totalorder %s21, 3
      %p190 = por %p188, %p189
      %p191 = scmp.ne.s32.totalorder %s183, %s186
      %p192 = scmp.eq.s32.totalorder %s21, 0
      %p193 = por %p191, %p192
      %p194 = scmp.ne.s32.totalorder %s183, %s186
      %p195 = scmp.eq.s32.totalorder %s26, 3
      %p196 = por %p194, %p195
      %p197 = scmp.ne.s32.totalorder %s186, %s187
      %p198 = scmp.eq.s32.totalorder %s26, 0
      %p199 = por %p197, %p198
      %p200 = scmp.ne.s32.totalorder %s186, %s187
      %p201 = scmp.eq.s32.totalorder %s27, 3
      %p202 = por %p200, %p201
      %p204 = scmp.ne.s32.totalorder %s187, %s203
      %p205 = scmp.eq.s32.totalorder %s27, 0
      %p206 = por %p204, %p205
      %p207 = scmp.le.s32.totalorder 1, %s21
      %p208 = scmp.lt.s32.totalorder %s21, 5
      %p209 = pnand %p207, %p208
      %p210 = pneg %p209
      // Predicated region
      $region9: #{tpu_custom_call.1} parent=5 // pred_check
        _
      $region10: #{tpu_custom_call.1} parent=5 // pred_check_branch
        %212 = sbr.rel (%p209) target = $region12
      $region11: #{tpu_custom_call.1} parent=5 // pred_region
        %s213 = ssub.s32 %s21, 1
        // Predicated region
        $region13: #{tpu_custom_call.1} parent=11 // pred_check
          %p214 = pneg %p68
        $region14: #{tpu_custom_call.1} parent=11 // pred_check_branch
          %216 = sbr.rel (%p214) target = $region16
        $region15: #{tpu_custom_call.1} parent=11 // pred_region
          %s218 = ssub.s32 2048, 2048
          %219 = vsyncadd [#allocation6], %s218
          %s220 = sshll.u32 [#allocation5], 4
          %s221 = int_to_ptr.vmem [resolvable:$true] %s220
          %226 = dma.hbm_to_vmem [thread:$0]  %s1, 2048, %s221, [#allocation6], 128, 128, 8
        $region16: #{tpu_custom_call.1} parent=11 // pred_fallthru
          _
        // Predicated region
        $region17: #{tpu_custom_call.1} parent=11 // pred_check
          %p227 = pneg %p89
        $region18: #{tpu_custom_call.1} parent=11 // pred_check_branch
          %229 = sbr.rel (%p227) target = $region20
        $region19: #{tpu_custom_call.1} parent=11 // pred_region
          _
        $region20: #{tpu_custom_call.1} parent=11 // pred_fallthru
          _
        // Predicated region
        $region21: #{tpu_custom_call.1} parent=11 // pred_check
          %p230 = pneg %p110
        $region22: #{tpu_custom_call.1} parent=11 // pred_check_branch
          %232 = sbr.rel (%p230) target = $region24
        $region23: #{tpu_custom_call.1} parent=11 // pred_region
          %s234 = ssub.s32 4096, 4096
          %235 = vsyncadd [#allocation6], %s234
          %s236 = sshll.u32 [#allocation7], 4
          %s237 = int_to_ptr.vmem [resolvable:$true] %s236
          %242 = dma.hbm_to_vmem [thread:$0]  %s3, 4096, %s237, [#allocation6], 128, 128, 8
        $region24: #{tpu_custom_call.1} parent=11 // pred_fallthru
          _
        // Predicated region
        $region25: #{tpu_custom_call.1} parent=11 // pred_check
          %p243 = pneg %p131
        $region26: #{tpu_custom_call.1} parent=11 // pred_check_branch
          %245 = sbr.rel (%p243) target = $region28
        $region27: #{tpu_custom_call.1} parent=11 // pred_region
          _
        $region28: #{tpu_custom_call.1} parent=11 // pred_fallthru
          _
        // Predicated region
        $region29: #{tpu_custom_call.1} parent=11 // pred_check
          %p246 = pneg %p152
        $region30: #{tpu_custom_call.1} parent=11 // pred_check_branch
          %248 = sbr.rel (%p246) target = $region32
        $region31: #{tpu_custom_call.1} parent=11 // pred_region
          %s250 = ssub.s32 2048, 2048
          %251 = vsyncadd [#allocation9], %s250
          %s252 = sshll.u32 [#allocation8], 4
          %s253 = int_to_ptr.vmem [resolvable:$true] %s252
          %258 = dma.hbm_to_vmem [thread:$0]  %s5, 2048, %s253, [#allocation9], 128, 128, 8
        $region32: #{tpu_custom_call.1} parent=11 // pred_fallthru
          _
        // Predicated region
        $region33: #{tpu_custom_call.1} parent=11 // pred_check
          %p259 = pneg %p173
        $region34: #{tpu_custom_call.1} parent=11 // pred_check_branch
          %261 = sbr.rel (%p259) target = $region36
        $region35: #{tpu_custom_call.1} parent=11 // pred_region
          _
        $region36: #{tpu_custom_call.1} parent=11 // pred_fallthru
          _
      $region12: #{tpu_custom_call.1} parent=5 // pred_fallthru
        _
      %p262 = scmp.lt.s32.totalorder %s21, 4
      // Predicated region
      $region37: #{tpu_custom_call.1} parent=5 // pred_check
        %p263 = pneg %p262
      $region38: #{tpu_custom_call.1} parent=5 // pred_check_branch
        %265 = sbr.rel (%p263) target = $region40
      $region39: #{tpu_custom_call.1} parent=5 // pred_region
        // Predicated region
        $region41: #{tpu_custom_call.1} parent=39 // pred_check
          %p266 = pneg %p41
        $region42: #{tpu_custom_call.1} parent=39 // pred_check_branch
          %268 = sbr.rel (%p266) target = $region44
        $region43: #{tpu_custom_call.1} parent=39 // pred_region
          %s269 = sand.u32 %s31, 1
          %s270 = scalar_lea.sflag [#allocation3], %s269
          %s271 = sand.u32 %s31, 1
          %s272 = smul.addr %s271, 64
          %s273 = scalar_lea.vmem [#allocation2], %s272
          %s274 = smul.u32 8, %s21
          %s276 = ssub.s32 1024, 1024
          %277 = vsyncadd %s270, %s276
          %s278 = smul.addr %s274, 128
          %s279 = scalar_lea.hbm %s0, %s278
          %s280 = sshll.u32 %s273, 4
          %s281 = int_to_ptr.vmem [resolvable:$true] %s280
          %286 = dma.hbm_to_vmem [thread:$0]  %s279, 1024, %s281, %s270, 128, 128, 8
        $region44: #{tpu_custom_call.1} parent=39 // pred_fallthru
          _
      $region40: #{tpu_custom_call.1} parent=5 // pred_fallthru
        _
      %p287 = scmp.le.s32.totalorder 1, %s21
      %p288 = scmp.lt.s32.totalorder %s21, 5
      %p289 = pnand %p287, %p288
      %p290 = pneg %p289
      // Predicated region
      $region45: #{tpu_custom_call.1} parent=5 // pred_check
        _
      $region46: #{tpu_custom_call.1} parent=5 // pred_check_branch
        %292 = sbr.rel (%p289) target = $region48
      $region47: #{tpu_custom_call.1} parent=5 // pred_region
        %s293 = ssub.s32 %s21, 1
        %s294 = sand.u32 %s34, 1
        %s295 = scalar_lea.sflag [#allocation3], %s294
        %s296 = sand.u32 %s34, 1
        %s297 = smul.addr %s296, 64
        %s298 = scalar_lea.vmem [#allocation2], %s297
        // Predicated region
        $region49: #{tpu_custom_call.1} parent=47 // pred_check
          %p299 = pneg %p47
        $region50: #{tpu_custom_call.1} parent=47 // pred_check_branch
          %301 = sbr.rel (%p299) target = $region52
        $region51: #{tpu_custom_call.1} parent=47 // pred_region
          %302 = dma.done %s295, 1024
        $region52: #{tpu_custom_call.1} parent=47 // pred_fallthru
          _
        // Predicated region
        $region53: #{tpu_custom_call.1} parent=47 // pred_check
          %p303 = pneg %p68
        $region54: #{tpu_custom_call.1} parent=47 // pred_check_branch
          %305 = sbr.rel (%p303) target = $region56
        $region55: #{tpu_custom_call.1} parent=47 // pred_region
          %306 = dma.done [#allocation6], 2048
        $region56: #{tpu_custom_call.1} parent=47 // pred_fallthru
          _
        // Predicated region
        $region57: #{tpu_custom_call.1} parent=47 // pred_check
          %p307 = pneg %p110
        $region58: #{tpu_custom_call.1} parent=47 // pred_check_branch
          %309 = sbr.rel (%p307) target = $region60
        $region59: #{tpu_custom_call.1} parent=47 // pred_region
          %310 = dma.done [#allocation6], 4096
        $region60: #{tpu_custom_call.1} parent=47 // pred_fallthru
          _
        // Predicated region
        $region61: #{tpu_custom_call.1} parent=47 // pred_check
          %p311 = pneg %p152
        $region62: #{tpu_custom_call.1} parent=47 // pred_check_branch
          %313 = sbr.rel (%p311) target = $region64
        $region63: #{tpu_custom_call.1} parent=47 // pred_region
          %314 = dma.done [#allocation9], 2048
        $region64: #{tpu_custom_call.1} parent=47 // pred_fallthru
          _
        %s315 = sand.u32 %s34, 1
        %s316 = scalar_lea.sflag [#allocation3], %s315
        %s317 = sand.u32 %s34, 1
        %s318 = smul.addr %s317, 64
        %s319 = scalar_lea.vmem [#allocation2], %s318
        %p320 = pneg %p47
        %p321 = pneg %p44
        %p322 = pneg %p68
        %p323 = pneg %p65
        %p324 = pneg %p89
        %p325 = pneg %p86
        %p326 = pneg %p110
        %p327 = pneg %p107
        %p328 = pneg %p131
        %p329 = pneg %p128
        %p330 = pneg %p152
        %p331 = pneg %p149
        %p332 = pneg %p173
        %p333 = pneg %p170
        %p334 = pneg %p199
        %p335 = pneg %p196
        %s336 = sand.u32 %s186, 1
        %s337 = scalar_lea.sflag [#allocation4], %s336
        %s338 = sand.u32 %s186, 1
        %s339 = smul.addr %s338, 64
        %s340 = scalar_lea.vmem [#allocation10], %s339
        %s341 = smul.u32 8, %s26
        %s342 = smul.u32 8, %s26
        %v343 = vld [vmem:[%s298] sm:$0xff]
        %v344 = vld [vmem:[%s298 + $0x8] sm:$0xff]
        %v345 = vld [vmem:[%s298 + $0x10] sm:$0xff]
        %v346 = vld [vmem:[%s298 + $0x18] sm:$0xff]
        %v347 = vld [vmem:[%s298 + $0x20] sm:$0xff]
        %v348 = vld [vmem:[%s298 + $0x28] sm:$0xff]
        %v349 = vld [vmem:[%s298 + $0x30] sm:$0xff]
        %v350 = vld [vmem:[%s298 + $0x38] sm:$0xff]
        %v351 = vld [vmem:[#allocation5] sm:$0xff]
        %v352 = vld [vmem:[#allocation5 + $0x8] sm:$0xff]
        %v353 = vld [vmem:[#allocation5 + $0x10] sm:$0xff]
        %v354 = vld [vmem:[#allocation5 + $0x18] sm:$0xff]
        %v355 = vld [vmem:[#allocation5 + $0x20] sm:$0xff]
        %v356 = vld [vmem:[#allocation5 + $0x28] sm:$0xff]
        %v357 = vld [vmem:[#allocation5 + $0x30] sm:$0xff]
        %v358 = vld [vmem:[#allocation5 + $0x38] sm:$0xff]
        %v359 = vld [vmem:[#allocation5 + $0x40] sm:$0xff]
        %v360 = vld [vmem:[#allocation5 + $0x48] sm:$0xff]
        %v361 = vld [vmem:[#allocation5 + $0x50] sm:$0xff]
        %v362 = vld [vmem:[#allocation5 + $0x58] sm:$0xff]
        %v363 = vld [vmem:[#allocation5 + $0x60] sm:$0xff]
        %v364 = vld [vmem:[#allocation5 + $0x68] sm:$0xff]
        %v365 = vld [vmem:[#allocation5 + $0x70] sm:$0xff]
        %v366 = vld [vmem:[#allocation5 + $0x78] sm:$0xff]
        %v367 = vld [vmem:[%s2] sm:$0x1]
        %v369 = vlaneseq
        %v370 = vshrl.u32 %v369, 7
        %v371 = vsub.s32 0, %v370
        %v372 = vrot.slane %v367, %v371
        %374 = vmatprep.subr.mxu0 0.0
        %375 = vmatpush1.msra.mxu0 %v366
        %376 = vmatprep.subr.mxu0 0.0
        %377 = vmatpush1.msra.mxu0 %v365
        %378 = vmatprep.subr.mxu0 0.0
        %379 = vmatpush1.msra.mxu0 %v364
        %380 = vmatprep.subr.mxu0 0.0
        %381 = vmatpush1.msra.mxu0 %v363
        %382 = vmatprep.subr.mxu0 0.0
        %383 = vmatpush1.msra.mxu0 %v362
        %384 = vmatprep.subr.mxu0 0.0
        %385 = vmatpush1.msra.mxu0 %v361
        %386 = vmatprep.subr.mxu0 0.0
        %387 = vmatpush1.msra.mxu0 %v360
        %388 = vmatprep.subr.mxu0 0.0
        %389 = vmatpush1.msra.mxu0 %v359
        %390 = vmatprep.subr.mxu0 0.0
        %391 = vmatpush1.msra.mxu0 %v358
        %392 = vmatprep.subr.mxu0 0.0
        %393 = vmatpush1.msra.mxu0 %v357
        %394 = vmatprep.subr.mxu0 0.0
        %395 = vmatpush1.msra.mxu0 %v356
        %396 = vmatprep.subr.mxu0 0.0
        %397 = vmatpush1.msra.mxu0 %v355
        %398 = vmatprep.subr.mxu0 0.0
        %399 = vmatpush1.msra.mxu0 %v354
        %400 = vmatprep.subr.mxu0 0.0
        %401 = vmatpush1.msra.mxu0 %v353
        %402 = vmatprep.subr.mxu0 0.0
        %403 = vmatpush1.msra.mxu0 %v352
        %404 = vmatprep.subr.mxu0 0.0
        %405 = vmatpush1.msra.mxu0 %v351
        %406 = vmatprep.subr.mxu0 0.0
        %407 = vmatpush2.msra.mxu0 0.0
        %408 = vmatprep.subr.mxu0 0.0
        %409 = vmatpush2.msra.mxu0 0.0
        %410 = vmatprep.subr.mxu0 0.0
        %411 = vmatpush2.msra.mxu0 0.0
        %412 = vmatprep.subr.mxu0 0.0
        %413 = vmatpush2.msra.mxu0 0.0
        %414 = vmatprep.subr.mxu0 0.0
        %415 = vmatpush2.msra.mxu0 0.0
        %416 = vmatprep.subr.mxu0 0.0
        %417 = vmatpush2.msra.mxu0 0.0
        %418 = vmatprep.subr.mxu0 0.0
        %419 = vmatpush2.msra.mxu0 0.0
        %420 = vmatprep.subr.mxu0 0.0
        %421 = vmatpush2.msra.mxu0 0.0
        %422 = vmatprep.subr.mxu0 0.0
        %423 = vmatpush2.msra.mxu0 0.0
        %424 = vmatprep.subr.mxu0 0.0
        %425 = vmatpush2.msra.mxu0 0.0
        %426 = vmatprep.subr.mxu0 0.0
        %427 = vmatpush2.msra.mxu0 0.0
        %428 = vmatprep.subr.mxu0 0.0
        %429 = vmatpush2.msra.mxu0 0.0
        %430 = vmatprep.subr.mxu0 0.0
        %431 = vmatpush2.msra.mxu0 0.0
        %432 = vmatprep.subr.mxu0 0.0
        %433 = vmatpush2.msra.mxu0 0.0
        %434 = vmatprep.subr.mxu0 0.0
        %435 = vmatpush2.msra.mxu0 0.0
        %436 = vmatprep.subr.mxu0 0.0
        %437 = vmatpush2.msra.mxu0 0.0
        %438 = vmatprep.mubr.f32.mxu0 0.0
        %439 = vmatmul.mubr.f32.gmra.mxu0 %v343
        %v440 = vpop.f32.mrf.mxu0
        %v441 = vadd.f32 %v372, %v440
        %v442 = vpop.f32.mrf.mxu0
        %443 = vmatprep.mubr.f32.mxu0 0.0
        %444 = vmatmul.mubr.f32.gmra.mxu0 %v344
        %v445 = vpop.f32.mrf.mxu0
        %v446 = vadd.f32 %v372, %v445
        %v447 = vpop.f32.mrf.mxu0
        %448 = vmatprep.mubr.f32.mxu0 0.0
        %449 = vmatmul.mubr.f32.gmra.mxu0 %v345
        %v450 = vpop.f32.mrf.mxu0
        %v451 = vadd.f32 %v372, %v450
        %v452 = vpop.f32.mrf.mxu0
        %453 = vmatprep.mubr.f32.mxu0 0.0
        %454 = vmatmul.mubr.f32.gmra.mxu0 %v346
        %v455 = vpop.f32.mrf.mxu0
        %v456 = vadd.f32 %v372, %v455
        %v457 = vpop.f32.mrf.mxu0
        %458 = vmatprep.mubr.f32.mxu0 0.0
        %459 = vmatmul.mubr.f32.gmra.mxu0 %v347
        %v460 = vpop.f32.mrf.mxu0
        %v461 = vadd.f32 %v372, %v460
        %v462 = vpop.f32.mrf.mxu0
        %463 = vmatprep.mubr.f32.mxu0 0.0
        %464 = vmatmul.mubr.f32.gmra.mxu0 %v348
        %v465 = vpop.f32.mrf.mxu0
        %v466 = vadd.f32 %v372, %v465
        %v467 = vpop.f32.mrf.mxu0
        %468 = vmatprep.mubr.f32.mxu0 0.0
        %469 = vmatmul.mubr.f32.gmra.mxu0 %v349
        %v470 = vpop.f32.mrf.mxu0
        %v471 = vadd.f32 %v372, %v470
        %v472 = vpop.f32.mrf.mxu0
        %473 = vmatprep.mubr.f32.mxu0 0.0
        %474 = vmatmul.mubr.f32.gmra.mxu0 %v350
        %v475 = vpop.f32.mrf.mxu0
        %v476 = vadd.f32 %v372, %v475
        %v477 = vpop.f32.mrf.mxu0
        %478 = vdwg.mxu0
        %v479 = vld [vmem:[#allocation7] sm:$0xff]
        %v480 = vld [vmem:[#allocation7 + $0x8] sm:$0xff]
        %v481 = vld [vmem:[#allocation7 + $0x10] sm:$0xff]
        %v482 = vld [vmem:[#allocation7 + $0x18] sm:$0xff]
        %v483 = vld [vmem:[#allocation7 + $0x20] sm:$0xff]
        %v484 = vld [vmem:[#allocation7 + $0x28] sm:$0xff]
        %v485 = vld [vmem:[#allocation7 + $0x30] sm:$0xff]
        %v486 = vld [vmem:[#allocation7 + $0x38] sm:$0xff]
        %v487 = vld [vmem:[#allocation7 + $0x40] sm:$0xff]
        %v488 = vld [vmem:[#allocation7 + $0x48] sm:$0xff]
        %v489 = vld [vmem:[#allocation7 + $0x50] sm:$0xff]
        %v490 = vld [vmem:[#allocation7 + $0x58] sm:$0xff]
        %v491 = vld [vmem:[#allocation7 + $0x60] sm:$0xff]
        %v492 = vld [vmem:[#allocation7 + $0x68] sm:$0xff]
        %v493 = vld [vmem:[#allocation7 + $0x70] sm:$0xff]
        %v494 = vld [vmem:[#allocation7 + $0x78] sm:$0xff]
        %v495 = vld [vmem:[%s4] sm:$0x1]
        %v497 = vlaneseq
        %v498 = vshrl.u32 %v497, 7
        %v499 = vsub.s32 0, %v498
        %v500 = vrot.slane %v495, %v499
        %502 = vmatprep.subr.mxu0 0.0
        %503 = vmatpush1.msra.mxu0 %v494
        %504 = vmatprep.subr.mxu0 0.0
        %505 = vmatpush1.msra.mxu0 %v493
        %506 = vmatprep.subr.mxu0 0.0
        %507 = vmatpush1.msra.mxu0 %v492
        %508 = vmatprep.subr.mxu0 0.0
        %509 = vmatpush1.msra.mxu0 %v491
        %510 = vmatprep.subr.mxu0 0.0
        %511 = vmatpush1.msra.mxu0 %v490
        %512 = vmatprep.subr.mxu0 0.0
        %513 = vmatpush1.msra.mxu0 %v489
        %514 = vmatprep.subr.mxu0 0.0
        %515 = vmatpush1.msra.mxu0 %v488
        %516 = vmatprep.subr.mxu0 0.0
        %517 = vmatpush1.msra.mxu0 %v487
        %518 = vmatprep.subr.mxu0 0.0
        %519 = vmatpush1.msra.mxu0 %v486
        %520 = vmatprep.subr.mxu0 0.0
        %521 = vmatpush1.msra.mxu0 %v485
        %522 = vmatprep.subr.mxu0 0.0
        %523 = vmatpush1.msra.mxu0 %v484
        %524 = vmatprep.subr.mxu0 0.0
        %525 = vmatpush1.msra.mxu0 %v483
        %526 = vmatprep.subr.mxu0 0.0
        %527 = vmatpush1.msra.mxu0 %v482
        %528 = vmatprep.subr.mxu0 0.0
        %529 = vmatpush1.msra.mxu0 %v481
        %530 = vmatprep.subr.mxu0 0.0
        %531 = vmatpush1.msra.mxu0 %v480
        %532 = vmatprep.subr.mxu0 0.0
        %533 = vmatpush1.msra.mxu0 %v479
        %534 = vmatprep.subr.mxu0 0.0
        %535 = vmatpush2.msra.mxu0 0.0
        %536 = vmatprep.subr.mxu0 0.0
        %537 = vmatpush2.msra.mxu0 0.0
        %538 = vmatprep.subr.mxu0 0.0
        %539 = vmatpush2.msra.mxu0 0.0
        %540 = vmatprep.subr.mxu0 0.0
        %541 = vmatpush2.msra.mxu0 0.0
        %542 = vmatprep.subr.mxu0 0.0
        %543 = vmatpush2.msra.mxu0 0.0
        %544 = vmatprep.subr.mxu0 0.0
        %545 = vmatpush2.msra.mxu0 0.0
        %546 = vmatprep.subr.mxu0 0.0
        %547 = vmatpush2.msra.mxu0 0.0
        %548 = vmatprep.subr.mxu0 0.0
        %549 = vmatpush2.msra.mxu0 0.0
        %550 = vmatprep.subr.mxu0 0.0
        %551 = vmatpush2.msra.mxu0 0.0
        %552 = vmatprep.subr.mxu0 0.0
        %553 = vmatpush2.msra.mxu0 0.0
        %554 = vmatprep.subr.mxu0 0.0
        %555 = vmatpush2.msra.mxu0 0.0
        %556 = vmatprep.subr.mxu0 0.0
        %557 = vmatpush2.msra.mxu0 0.0
        %558 = vmatprep.subr.mxu0 0.0
        %559 = vmatpush2.msra.mxu0 0.0
        %560 = vmatprep.subr.mxu0 0.0
        %561 = vmatpush2.msra.mxu0 0.0
        %562 = vmatprep.subr.mxu0 0.0
        %563 = vmatpush2.msra.mxu0 0.0
        %564 = vmatprep.subr.mxu0 0.0
        %565 = vmatpush2.msra.mxu0 0.0
        %566 = vmatprep.mubr.f32.mxu0 0.0
        %567 = vmatmul.mubr.f32.gmra.mxu0 %v441
        %v568 = vpop.f32.mrf.mxu0
        %v569 = vadd.f32 %v500, %v568
        %v570 = vpop.f32.mrf.mxu0
        %571 = vmatprep.mubr.f32.mxu0 0.0
        %572 = vmatmul.mubr.f32.gmra.mxu0 %v446
        %v573 = vpop.f32.mrf.mxu0
        %v574 = vadd.f32 %v500, %v573
        %v575 = vpop.f32.mrf.mxu0
        %576 = vmatprep.mubr.f32.mxu0 0.0
        %577 = vmatmul.mubr.f32.gmra.mxu0 %v451
        %v578 = vpop.f32.mrf.mxu0
        %v579 = vadd.f32 %v500, %v578
        %v580 = vpop.f32.mrf.mxu0
        %581 = vmatprep.mubr.f32.mxu0 0.0
        %582 = vmatmul.mubr.f32.gmra.mxu0 %v456
        %v583 = vpop.f32.mrf.mxu0
        %v584 = vadd.f32 %v500, %v583
        %v585 = vpop.f32.mrf.mxu0
        %586 = vmatprep.mubr.f32.mxu0 0.0
        %587 = vmatmul.mubr.f32.gmra.mxu0 %v461
        %v588 = vpop.f32.mrf.mxu0
        %v589 = vadd.f32 %v500, %v588
        %v590 = vpop.f32.mrf.mxu0
        %591 = vmatprep.mubr.f32.mxu0 0.0
        %592 = vmatmul.mubr.f32.gmra.mxu0 %v466
        %v593 = vpop.f32.mrf.mxu0
        %v594 = vadd.f32 %v500, %v593
        %v595 = vpop.f32.mrf.mxu0
        %596 = vmatprep.mubr.f32.mxu0 0.0
        %597 = vmatmul.mubr.f32.gmra.mxu0 %v471
        %v598 = vpop.f32.mrf.mxu0
        %v599 = vadd.f32 %v500, %v598
        %v600 = vpop.f32.mrf.mxu0
        %601 = vmatprep.mubr.f32.mxu0 0.0
        %602 = vmatmul.mubr.f32.gmra.mxu0 %v476
        %v603 = vpop.f32.mrf.mxu0
        %v604 = vadd.f32 %v500, %v603
        %v605 = vpop.f32.mrf.mxu0
        %606 = vdwg.mxu0
        %v607 = vtanh.pop %v569
        %v608 = vtanh.pop %v574
        %v609 = vtanh.pop %v579
        %v610 = vtanh.pop %v584
        %v611 = vtanh.pop %v589
        %v612 = vtanh.pop %v594
        %v613 = vtanh.pop %v599
        %v614 = vtanh.pop %v604
        %s615 = scalar_lea.vmem [#allocation7], 128
        %v616 = vld [vmem:[%s615] sm:$0xff]
        %v617 = vld [vmem:[%s615 + $0x8] sm:$0xff]
        %v618 = vld [vmem:[%s615 + $0x10] sm:$0xff]
        %v619 = vld [vmem:[%s615 + $0x18] sm:$0xff]
        %v620 = vld [vmem:[%s615 + $0x20] sm:$0xff]
        %v621 = vld [vmem:[%s615 + $0x28] sm:$0xff]
        %v622 = vld [vmem:[%s615 + $0x30] sm:$0xff]
        %v623 = vld [vmem:[%s615 + $0x38] sm:$0xff]
        %v624 = vld [vmem:[%s615 + $0x40] sm:$0xff]
        %v625 = vld [vmem:[%s615 + $0x48] sm:$0xff]
        %v626 = vld [vmem:[%s615 + $0x50] sm:$0xff]
        %v627 = vld [vmem:[%s615 + $0x58] sm:$0xff]
        %v628 = vld [vmem:[%s615 + $0x60] sm:$0xff]
        %v629 = vld [vmem:[%s615 + $0x68] sm:$0xff]
        %v630 = vld [vmem:[%s615 + $0x70] sm:$0xff]
        %v631 = vld [vmem:[%s615 + $0x78] sm:$0xff]
        %s632 = scalar_lea.vmem %s4, 1
        %v633 = vld [vmem:[%s632] sm:$0x1]
        %v635 = vlaneseq
        %v636 = vshrl.u32 %v635, 7
        %v637 = vsub.s32 0, %v636
        %v638 = vrot.slane %v633, %v637
        %640 = vmatprep.subr.mxu0 0.0
        %641 = vmatpush1.msra.mxu0 %v631
        %642 = vmatprep.subr.mxu0 0.0
        %643 = vmatpush1.msra.mxu0 %v630
        %644 = vmatprep.subr.mxu0 0.0
        %645 = vmatpush1.msra.mxu0 %v629
        %646 = vmatprep.subr.mxu0 0.0
        %647 = vmatpush1.msra.mxu0 %v628
        %648 = vmatprep.subr.mxu0 0.0
        %649 = vmatpush1.msra.mxu0 %v627
        %650 = vmatprep.subr.mxu0 0.0
        %651 = vmatpush1.msra.mxu0 %v626
        %652 = vmatprep.subr.mxu0 0.0
        %653 = vmatpush1.msra.mxu0 %v625
        %654 = vmatprep.subr.mxu0 0.0
        %655 = vmatpush1.msra.mxu0 %v624
        %656 = vmatprep.subr.mxu0 0.0
        %657 = vmatpush1.msra.mxu0 %v623
        %658 = vmatprep.subr.mxu0 0.0
        %659 = vmatpush1.msra.mxu0 %v622
        %660 = vmatprep.subr.mxu0 0.0
        %661 = vmatpush1.msra.mxu0 %v621
        %662 = vmatprep.subr.mxu0 0.0
        %663 = vmatpush1.msra.mxu0 %v620
        %664 = vmatprep.subr.mxu0 0.0
        %665 = vmatpush1.msra.mxu0 %v619
        %666 = vmatprep.subr.mxu0 0.0
        %667 = vmatpush1.msra.mxu0 %v618
        %668 = vmatprep.subr.mxu0 0.0
        %669 = vmatpush1.msra.mxu0 %v617
        %670 = vmatprep.subr.mxu0 0.0
        %671 = vmatpush1.msra.mxu0 %v616
        %672 = vmatprep.subr.mxu0 0.0
        %673 = vmatpush2.msra.mxu0 0.0
        %674 = vmatprep.subr.mxu0 0.0
        %675 = vmatpush2.msra.mxu0 0.0
        %676 = vmatprep.subr.mxu0 0.0
        %677 = vmatpush2.msra.mxu0 0.0
        %678 = vmatprep.subr.mxu0 0.0
        %679 = vmatpush2.msra.mxu0 0.0
        %680 = vmatprep.subr.mxu0 0.0
        %681 = vmatpush2.msra.mxu0 0.0
        %682 = vmatprep.subr.mxu0 0.0
        %683 = vmatpush2.msra.mxu0 0.0
        %684 = vmatprep.subr.mxu0 0.0
        %685 = vmatpush2.msra.mxu0 0.0
        %686 = vmatprep.subr.mxu0 0.0
        %687 = vmatpush2.msra.mxu0 0.0
        %688 = vmatprep.subr.mxu0 0.0
        %689 = vmatpush2.msra.mxu0 0.0
        %690 = vmatprep.subr.mxu0 0.0
        %691 = vmatpush2.msra.mxu0 0.0
        %692 = vmatprep.subr.mxu0 0.0
        %693 = vmatpush2.msra.mxu0 0.0
        %694 = vmatprep.subr.mxu0 0.0
        %695 = vmatpush2.msra.mxu0 0.0
        %696 = vmatprep.subr.mxu0 0.0
        %697 = vmatpush2.msra.mxu0 0.0
        %698 = vmatprep.subr.mxu0 0.0
        %699 = vmatpush2.msra.mxu0 0.0
        %700 = vmatprep.subr.mxu0 0.0
        %701 = vmatpush2.msra.mxu0 0.0
        %702 = vmatprep.subr.mxu0 0.0
        %703 = vmatpush2.msra.mxu0 0.0
        %704 = vmatprep.mubr.f32.mxu0 0.0
        %705 = vmatmul.mubr.f32.gmra.mxu0 %v607
        %v706 = vpop.f32.mrf.mxu0
        %v707 = vadd.f32 %v638, %v706
        %v708 = vpop.f32.mrf.mxu0
        %709 = vmatprep.mubr.f32.mxu0 0.0
        %710 = vmatmul.mubr.f32.gmra.mxu0 %v608
        %v711 = vpop.f32.mrf.mxu0
        %v712 = vadd.f32 %v638, %v711
        %v713 = vpop.f32.mrf.mxu0
        %714 = vmatprep.mubr.f32.mxu0 0.0
        %715 = vmatmul.mubr.f32.gmra.mxu0 %v609
        %v716 = vpop.f32.mrf.mxu0
        %v717 = vadd.f32 %v638, %v716
        %v718 = vpop.f32.mrf.mxu0
        %719 = vmatprep.mubr.f32.mxu0 0.0
        %720 = vmatmul.mubr.f32.gmra.mxu0 %v610
        %v721 = vpop.f32.mrf.mxu0
        %v722 = vadd.f32 %v638, %v721
        %v723 = vpop.f32.mrf.mxu0
        %724 = vmatprep.mubr.f32.mxu0 0.0
        %725 = vmatmul.mubr.f32.gmra.mxu0 %v611
        %v726 = vpop.f32.mrf.mxu0
        %v727 = vadd.f32 %v638, %v726
        %v728 = vpop.f32.mrf.mxu0
        %729 = vmatprep.mubr.f32.mxu0 0.0
        %730 = vmatmul.mubr.f32.gmra.mxu0 %v612
        %v731 = vpop.f32.mrf.mxu0
        %v732 = vadd.f32 %v638, %v731
        %v733 = vpop.f32.mrf.mxu0
        %734 = vmatprep.mubr.f32.mxu0 0.0
        %735 = vmatmul.mubr.f32.gmra.mxu0 %v613
        %v736 = vpop.f32.mrf.mxu0
        %v737 = vadd.f32 %v638, %v736
        %v738 = vpop.f32.mrf.mxu0
        %739 = vmatprep.mubr.f32.mxu0 0.0
        %740 = vmatmul.mubr.f32.gmra.mxu0 %v614
        %v741 = vpop.f32.mrf.mxu0
        %v742 = vadd.f32 %v638, %v741
        %v743 = vpop.f32.mrf.mxu0
        %744 = vdwg.mxu0
        %v745 = vtanh.pop %v707
        %v746 = vtanh.pop %v712
        %v747 = vtanh.pop %v717
        %v748 = vtanh.pop %v722
        %v749 = vtanh.pop %v727
        %v750 = vtanh.pop %v732
        %v751 = vtanh.pop %v737
        %v752 = vtanh.pop %v742
        %v753 = vld [vmem:[#allocation8] sm:$0xff]
        %v754 = vld [vmem:[#allocation8 + $0x8] sm:$0xff]
        %v755 = vld [vmem:[#allocation8 + $0x10] sm:$0xff]
        %v756 = vld [vmem:[#allocation8 + $0x18] sm:$0xff]
        %v757 = vld [vmem:[#allocation8 + $0x20] sm:$0xff]
        %v758 = vld [vmem:[#allocation8 + $0x28] sm:$0xff]
        %v759 = vld [vmem:[#allocation8 + $0x30] sm:$0xff]
        %v760 = vld [vmem:[#allocation8 + $0x38] sm:$0xff]
        %v761 = vld [vmem:[#allocation8 + $0x40] sm:$0xff]
        %v762 = vld [vmem:[#allocation8 + $0x48] sm:$0xff]
        %v763 = vld [vmem:[#allocation8 + $0x50] sm:$0xff]
        %v764 = vld [vmem:[#allocation8 + $0x58] sm:$0xff]
        %v765 = vld [vmem:[#allocation8 + $0x60] sm:$0xff]
        %v766 = vld [vmem:[#allocation8 + $0x68] sm:$0xff]
        %v767 = vld [vmem:[#allocation8 + $0x70] sm:$0xff]
        %v768 = vld [vmem:[#allocation8 + $0x78] sm:$0xff]
        %v769 = vld [vmem:[%s6] sm:$0x1]
        %v771 = vlaneseq
        %v772 = vshrl.u32 %v771, 7
        %v773 = vsub.s32 0, %v772
        %v774 = vrot.slane %v769, %v773
        %776 = vmatprep.subr.mxu0 0.0
        %777 = vmatpush1.msra.mxu0 %v768
        %778 = vmatprep.subr.mxu0 0.0
        %779 = vmatpush1.msra.mxu0 %v767
        %780 = vmatprep.subr.mxu0 0.0
        %781 = vmatpush1.msra.mxu0 %v766
        %782 = vmatprep.subr.mxu0 0.0
        %783 = vmatpush1.msra.mxu0 %v765
        %784 = vmatprep.subr.mxu0 0.0
        %785 = vmatpush1.msra.mxu0 %v764
        %786 = vmatprep.subr.mxu0 0.0
        %787 = vmatpush1.msra.mxu0 %v763
        %788 = vmatprep.subr.mxu0 0.0
        %789 = vmatpush1.msra.mxu0 %v762
        %790 = vmatprep.subr.mxu0 0.0
        %791 = vmatpush1.msra.mxu0 %v761
        %792 = vmatprep.subr.mxu0 0.0
        %793 = vmatpush1.msra.mxu0 %v760
        %794 = vmatprep.subr.mxu0 0.0
        %795 = vmatpush1.msra.mxu0 %v759
        %796 = vmatprep.subr.mxu0 0.0
        %797 = vmatpush1.msra.mxu0 %v758
        %798 = vmatprep.subr.mxu0 0.0
        %799 = vmatpush1.msra.mxu0 %v757
        %800 = vmatprep.subr.mxu0 0.0
        %801 = vmatpush1.msra.mxu0 %v756
        %802 = vmatprep.subr.mxu0 0.0
        %803 = vmatpush1.msra.mxu0 %v755
        %804 = vmatprep.subr.mxu0 0.0
        %805 = vmatpush1.msra.mxu0 %v754
        %806 = vmatprep.subr.mxu0 0.0
        %807 = vmatpush1.msra.mxu0 %v753
        %808 = vmatprep.subr.mxu0 0.0
        %809 = vmatpush2.msra.mxu0 0.0
        %810 = vmatprep.subr.mxu0 0.0
        %811 = vmatpush2.msra.mxu0 0.0
        %812 = vmatprep.subr.mxu0 0.0
        %813 = vmatpush2.msra.mxu0 0.0
        %814 = vmatprep.subr.mxu0 0.0
        %815 = vmatpush2.msra.mxu0 0.0
        %816 = vmatprep.subr.mxu0 0.0
        %817 = vmatpush2.msra.mxu0 0.0
        %818 = vmatprep.subr.mxu0 0.0
        %819 = vmatpush2.msra.mxu0 0.0
        %820 = vmatprep.subr.mxu0 0.0
        %821 = vmatpush2.msra.mxu0 0.0
        %822 = vmatprep.subr.mxu0 0.0
        %823 = vmatpush2.msra.mxu0 0.0
        %824 = vmatprep.subr.mxu0 0.0
        %825 = vmatpush2.msra.mxu0 0.0
        %826 = vmatprep.subr.mxu0 0.0
        %827 = vmatpush2.msra.mxu0 0.0
        %828 = vmatprep.subr.mxu0 0.0
        %829 = vmatpush2.msra.mxu0 0.0
        %830 = vmatprep.subr.mxu0 0.0
        %831 = vmatpush2.msra.mxu0 0.0
        %832 = vmatprep.subr.mxu0 0.0
        %833 = vmatpush2.msra.mxu0 0.0
        %834 = vmatprep.subr.mxu0 0.0
        %835 = vmatpush2.msra.mxu0 0.0
        %836 = vmatprep.subr.mxu0 0.0
        %837 = vmatpush2.msra.mxu0 0.0
        %838 = vmatprep.subr.mxu0 0.0
        %839 = vmatpush2.msra.mxu0 0.0
        %840 = vmatprep.mubr.f32.mxu0 0.0
        %841 = vmatmul.mubr.f32.gmra.mxu0 %v745
        %v842 = vpop.f32.mrf.mxu0
        %v843 = vadd.f32 %v774, %v842
        %v844 = vpop.f32.mrf.mxu0
        %845 = vmatprep.mubr.f32.mxu0 0.0
        %846 = vmatmul.mubr.f32.gmra.mxu0 %v746
        %v847 = vpop.f32.mrf.mxu0
        %v848 = vadd.f32 %v774, %v847
        %v849 = vpop.f32.mrf.mxu0
        %850 = vmatprep.mubr.f32.mxu0 0.0
        %851 = vmatmul.mubr.f32.gmra.mxu0 %v747
        %v852 = vpop.f32.mrf.mxu0
        %v853 = vadd.f32 %v774, %v852
        %v854 = vpop.f32.mrf.mxu0
        %855 = vmatprep.mubr.f32.mxu0 0.0
        %856 = vmatmul.mubr.f32.gmra.mxu0 %v748
        %v857 = vpop.f32.mrf.mxu0
        %v858 = vadd.f32 %v774, %v857
        %v859 = vpop.f32.mrf.mxu0
        %860 = vmatprep.mubr.f32.mxu0 0.0
        %861 = vmatmul.mubr.f32.gmra.mxu0 %v749
        %v862 = vpop.f32.mrf.mxu0
        %v863 = vadd.f32 %v774, %v862
        %v864 = vpop.f32.mrf.mxu0
        %865 = vmatprep.mubr.f32.mxu0 0.0
        %866 = vmatmul.mubr.f32.gmra.mxu0 %v750
        %v867 = vpop.f32.mrf.mxu0
        %v868 = vadd.f32 %v774, %v867
        %v869 = vpop.f32.mrf.mxu0
        %870 = vmatprep.mubr.f32.mxu0 0.0
        %871 = vmatmul.mubr.f32.gmra.mxu0 %v751
        %v872 = vpop.f32.mrf.mxu0
        %v873 = vadd.f32 %v774, %v872
        %v874 = vpop.f32.mrf.mxu0
        %875 = vmatprep.mubr.f32.mxu0 0.0
        %876 = vmatmul.mubr.f32.gmra.mxu0 %v752
        %v877 = vpop.f32.mrf.mxu0
        %v878 = vadd.f32 %v774, %v877
        %v879 = vpop.f32.mrf.mxu0
        %880 = vdwg.mxu0
        %881 = vst [vmem:[%s340] sm:$0xff] %v843
        %882 = vst [vmem:[%s340 + $0x8] sm:$0xff] %v848
        %883 = vst [vmem:[%s340 + $0x10] sm:$0xff] %v853
        %884 = vst [vmem:[%s340 + $0x18] sm:$0xff] %v858
        %885 = vst [vmem:[%s340 + $0x20] sm:$0xff] %v863
        %886 = vst [vmem:[%s340 + $0x28] sm:$0xff] %v868
        %887 = vst [vmem:[%s340 + $0x30] sm:$0xff] %v873
        %888 = vst [vmem:[%s340 + $0x38] sm:$0xff] %v878
        %s889 = sand.u32 %s186, 1
        %s890 = scalar_lea.sflag [#allocation4], %s889
        %s891 = sand.u32 %s186, 1
        %s892 = smul.addr %s891, 64
        %s893 = scalar_lea.vmem [#allocation10], %s892
        // Predicated region
        $region65: #{tpu_custom_call.1} parent=47 // pred_check
          %p894 = pneg %p196
        $region66: #{tpu_custom_call.1} parent=47 // pred_check_branch
          %896 = sbr.rel (%p894) target = $region68
        $region67: #{tpu_custom_call.1} parent=47 // pred_region
          %s897 = smul.u32 8, %s26
          %s899 = ssub.s32 1024, 1024
          %900 = vsyncadd %s890, %s899
          %s901 = smul.addr %s897, 128
          %s902 = scalar_lea.hbm %s7, %s901
          %s903 = sshll.u32 %s893, 4
          %s904 = int_to_ptr.vmem [resolvable:$true] %s903
          %909 = dma.vmem_to_hbm [thread:$0]  %s904, 1024, %s902, %s890, 128, 128, 8
        $region68: #{tpu_custom_call.1} parent=47 // pred_fallthru
          _
      $region48: #{tpu_custom_call.1} parent=5 // pred_fallthru
        _
      %p910 = scmp.le.s32.totalorder 2, %s21
      // Predicated region
      $region69: #{tpu_custom_call.1} parent=5 // pred_check
        %p911 = pneg %p910
      $region70: #{tpu_custom_call.1} parent=5 // pred_check_branch
        %913 = sbr.rel (%p911) target = $region72
      $region71: #{tpu_custom_call.1} parent=5 // pred_region
        %s914 = ssub.s32 %s21, 2
        // Predicated region
        $region73: #{tpu_custom_call.1} parent=71 // pred_check
          %p915 = pneg %p202
        $region74: #{tpu_custom_call.1} parent=71 // pred_check_branch
          %917 = sbr.rel (%p915) target = $region76
        $region75: #{tpu_custom_call.1} parent=71 // pred_region
          %s918 = sand.u32 %s187, 1
          %s919 = scalar_lea.sflag [#allocation4], %s918
          %s920 = sand.u32 %s187, 1
          %s921 = smul.addr %s920, 64
          %s922 = scalar_lea.vmem [#allocation10], %s921
          %923 = dma.done %s919, 1024
        $region76: #{tpu_custom_call.1} parent=71 // pred_fallthru
          _
      $region72: #{tpu_custom_call.1} parent=5 // pred_fallthru
        _
    $region6: #{tpu_custom_call.1} parent=1 // loop_footer
      %s25 = sadd.s32 1, %s21
    $region7: #{tpu_custom_call.1} parent=1 // loop_footer_branch
      %20 = sbr.rel target = $region3
    $region8: #{tpu_custom_call.1} parent=1 // loop_exit
      _
    %924 = vsyncpa [#allocation3], 1
    %s925 = scalar_lea.sflag [#allocation3], 1
    %926 = vsyncpa %s925, 1
    %927 = vsyncpa [#allocation6], 1
    %928 = vsyncpa [#allocation9], 1
    %929 = vsyncpa [#allocation4], 1
    %s930 = scalar_lea.sflag [#allocation4], 1
    %931 = vsyncpa %s930, 1

</llo_original>
